<compile_context>
chip_gen: v7x
topology: tpu7x:2x2x1
jax: 0.10.0
libtpu: 0.0.40
codegen_flags: <defaults>
</compile_context>

<pallas_src>
import functools

import jax
import jax.numpy as jnp
from jax import lax
from jax.experimental import pallas as pl
from jax.experimental.pallas import tpu as pltpu


def _divisor_tiles(dim, candidates):
    """Candidate tile sizes (lane/sublane-friendly) that evenly divide dim."""
    tiles = [t for t in candidates if t <= dim and dim % t == 0]
    return tiles or [dim]


# ---------------------------------------------------------------------------
# Kernel 1: fused GeM pooling + adaptive average pooling + sum (native NCHW)
#   in : x tile (TN, TC, HW) of the (N, C, HW) feature map
#   out: (TN, TC) tile of (N, C)  =  GeM(x) + AvgPool(x)
# ---------------------------------------------------------------------------
def pool_kernel(x_ref, o_ref, *, p, eps, inv_hw):
    x = x_ref[...].astype(jnp.float32)                  # (TN, TC, HW)
    s1 = jnp.sum(x, axis=-1)                            # raw spatial sum (TN, TC)
    xc = jnp.maximum(x, eps)                            # clamp(min=eps)
    if p == 3.0:
        xp = xc * xc * xc                               # VPU cubes, no per-elem EUP
    else:
        # TODO(synk): GeM `p` is a learnable nn.Parameter in the reference; if it
        # trains, pass it as an SMEM scalar (scalar prefetch) instead of baking it.
        xp = jnp.exp(p * jnp.log(xc))                   # generic power fallback
    s3 = jnp.sum(xp, axis=-1)                           # (TN, TC)
    m = s3 * inv_hw                                     # spatial mean of x^p
    gem = jnp.exp(jnp.log(m) * (1.0 / p))               # m^(1/p) on reduced tile only
    o_ref[...] = (gem + s1 * inv_hw).astype(o_ref.dtype)


def gem_plus_avg_pool(x_nchw, *, p=3.0, eps=1e-6, block_bytes=4 << 20):
    n, c, h, w = x_nchw.shape
    hw = h * w
    # Free reshape (NCHW is contiguous): no HBM transpose needed.
    x = x_nchw.reshape(n, c, hw)
    itemsize = jnp.dtype(x.dtype).itemsize

    tc_cands = _divisor_tiles(c, (512, 384, 256, 128))
    tn_cands = _divisor_tiles(n, (64, 32, 16, 8, 4, 2, 1))
    ti, ci = 0, 0
    tn, tc = tn_cands[ti], tc_cands[ci]
    # Shrink the N tile first, then the C tile, to stay within the per-block
    # VMEM budget (the pipeline double-buffers each input block).
    while tn * tc * hw * itemsize > block_bytes:
        if ti + 1 < len(tn_cands):
            ti += 1
            tn = tn_cands[ti]
        elif ci + 1 < len(tc_cands):
            ci += 1
            tc = tc_cands[ci]
        else:
            break

    grid = (n // tn, c // tc)
    return pl.pallas_call(
        functools.partial(pool_kernel, p=p, eps=eps, inv_hw=1.0 / hw),
        out_shape=jax.ShapeDtypeStruct((n, c), jnp.float32),
        grid=grid,
        in_specs=[pl.BlockSpec((tn, tc, hw), lambda i, j: (i, j, 0))],
        out_specs=pl.BlockSpec((tn, tc), lambda i, j: (i, j)),
        compiler_params=pltpu.CompilerParams(
            dimension_semantics=("parallel", "parallel")),
    )(x)


# ---------------------------------------------------------------------------
# Kernel 2: BatchNorm1d (training-mode batch stats) + Linear classifier,
#           tiled over the class dimension K (weight streamed through VMEM).
#   in : feat (N, C), gamma (1, C), beta (1, C), w_t tile (C, TK)
#   out: cls_score tile (N, TK), bn_feat (N, C) [resident, written at k==0]
# ---------------------------------------------------------------------------
def head_kernel(feat_ref, gamma_ref, beta_ref, w_ref,
                cls_ref, bnfeat_ref, y_scr, *, bn_eps, matmul_dtype):
    @pl.when(pl.program_id(0) == 0)
    def _():
        x = feat_ref[...]                               # (N, C)
        mean = jnp.mean(x, axis=0, keepdims=True)       # batch statistics (training)
        var = jnp.mean((x - mean) ** 2, axis=0, keepdims=True)  # biased variance
        y = (x - mean) * lax.rsqrt(var + bn_eps) * gamma_ref[...] + beta_ref[...]
        y_scr[...] = y                                  # reused by every K-tile
        bnfeat_ref[...] = y                             # resident output block

    cls_ref[...] = jnp.dot(y_scr[...].astype(matmul_dtype),
                           w_ref[...].astype(matmul_dtype),
                           preferred_element_type=jnp.float32)


def bn_linear_head(global_feat, gamma, beta, w_t, *, bn_eps=1e-5,
                   matmul_dtype=jnp.float32, block_bytes=4 << 20):
    n, c = global_feat.shape
    k = w_t.shape[1]
    tk_cands = _divisor_tiles(k, (512, 384, 256, 128))
    tk = next((t for t in tk_cands if c * t * 4 <= block_bytes), tk_cands[-1])

    grid = (k // tk,)
    cls_score, bn_feat = pl.pallas_call(
        functools.partial(head_kernel, bn_eps=bn_eps, matmul_dtype=matmul_dtype),
        out_shape=(
            jax.ShapeDtypeStruct((n, k), jnp.float32),
            jax.ShapeDtypeStruct((n, c), jnp.float32),
        ),
        grid=grid,
        in_specs=[
            pl.BlockSpec((n, c), lambda kk: (0, 0)),    # feat: resident across K-tiles
            pl.BlockSpec((1, c), lambda kk: (0, 0)),
            pl.BlockSpec((1, c), lambda kk: (0, 0)),
            pl.BlockSpec((c, tk), lambda kk: (0, kk)),  # classifier weight: streamed
        ],
        out_specs=(
            pl.BlockSpec((n, tk), lambda kk: (0, kk)),  # lane-dense logits tile
            pl.BlockSpec((n, c), lambda kk: (0, 0)),    # resident, written at kk==0
        ),
        scratch_shapes=[pltpu.VMEM((n, c), jnp.float32)],
        compiler_params=pltpu.CompilerParams(
            # K-tiles reuse the BN scratch computed at kk==0 and share the
            # resident bn_feat block -> keep this axis sequential on one core
            # (also keeps whole-batch BN statistics correct).
            dimension_semantics=("arbitrary",)),
    )(global_feat, gamma, beta, w_t)
    return cls_score, bn_feat


# ---------------------------------------------------------------------------
# Full Baseline_2_Head forward (training path, Linear classifier)
# ---------------------------------------------------------------------------
def baseline_2_head_forward(featmap_low, featmap, gamma, beta, w_t, *,
                            gem_p=3.0, gem_eps=1e-6, bn_eps=1e-5,
                            matmul_dtype=jnp.float32):
    # GeM + AdaptiveAvgPool, flattened and summed (per feature map)
    pooled_low = gem_plus_avg_pool(featmap_low, p=gem_p, eps=gem_eps)   # (N, C_low)
    pooled_hi = gem_plus_avg_pool(featmap, p=gem_p, eps=gem_eps)        # (N, C_high)
    # torch.cat((featmap, featmap_low), dim=1) -- tiny (N, C) arrays, XLA concat is cheap
    global_feat = jnp.concatenate([pooled_hi, pooled_low], axis=1)
    cls_score, feat = bn_linear_head(global_feat, gamma, beta, w_t,
                                     bn_eps=bn_eps, matmul_dtype=matmul_dtype)
    # TODO(synk): training-mode BN does not update running_mean/running_var here
    # (forward-only); flag if the head is used for actual training steps.
    return cls_score, feat, global_feat


# ---------------------------------------------------------------------------
# Pure-JAX reference (for a correctness sanity check)
# ---------------------------------------------------------------------------
def reference_forward(featmap_low, featmap, gamma, beta, w_t,
                      p=3.0, gem_eps=1e-6, bn_eps=1e-5):
    def pool(x):
        n, c, h, w = x.shape
        xf = x.reshape(n, c, h * w)
        gem = jnp.mean(jnp.clip(xf, gem_eps, None) ** p, axis=-1) ** (1.0 / p)
        ada = jnp.mean(xf, axis=-1)
        return gem + ada

    gf = jnp.concatenate([pool(featmap), pool(featmap_low)], axis=1)
    mean = jnp.mean(gf, axis=0, keepdims=True)
    var = jnp.mean((gf - mean) ** 2, axis=0, keepdims=True)
    y = (gf - mean) / jnp.sqrt(var + bn_eps) * gamma + beta
    return y @ w_t, y, gf


if __name__ == "__main__":
    # Small shapes consistent with the module structure:
    #   featmap_low : stage-3-like map (N, C_low,  16, 16)
    #   featmap     : stage-4-like map (N, C_high,  8,  8)
    N, C_LOW, C_HIGH = 2, 128, 256
    H_LOW = W_LOW = 16
    H_HIGH = W_HIGH = 8
    NUM_CLASSES = 128
    C_TOTAL = C_HIGH + C_LOW                         # analogue of in_planes = 2048 + 1024

    key = jax.random.PRNGKey(0)
    k1, k2, k3, k4 = jax.random.split(key, 4)

    # backbone outputs (post-ReLU-like, nonnegative)
    featmap_low = jax.random.uniform(k1, (N, C_LOW, H_LOW, W_LOW), jnp.float32)
    featmap = jax.random.uniform(k2, (N, C_HIGH, H_HIGH, W_HIGH), jnp.float32)

    # parameters (deterministic, matching the module's init schemes)
    gamma = 0.001 * jax.random.normal(k3, (1, C_TOTAL), jnp.float32)   # BN weight ~ N(0, 0.001)
    beta = jnp.zeros((1, C_TOTAL), jnp.float32)                        # BN bias = 0 (frozen)
    w_t = 0.001 * jax.random.normal(k4, (C_TOTAL, NUM_CLASSES), jnp.float32)  # classifier.weight.T

    cls_score, feat, global_feat = baseline_2_head_forward(
        featmap_low, featmap, gamma, beta, w_t)
    jax.block_until_ready((cls_score, feat, global_feat))

    ref_cls, ref_feat, ref_gf = reference_forward(
        featmap_low, featmap, gamma, beta, w_t)

    assert cls_score.shape == (N, NUM_CLASSES)
    assert feat.shape == (N, C_TOTAL)
    assert global_feat.shape == (N, C_TOTAL)
    assert jnp.allclose(global_feat, ref_gf, atol=1e-4, rtol=1e-4)
    assert jnp.allclose(feat, ref_feat, atol=1e-3, rtol=1e-3)
    assert jnp.allclose(cls_score, ref_cls, atol=1e-4, rtol=1e-4)

    print("KERNEL_OK")
</pallas_src>

<mosaic_0001>
module attributes {stable_mosaic.version = 11 : i64} {
  func.func @pool_kernel(%arg0: i32, %arg1: i32, %arg2: memref<2x128x256xf32, #tpu.memory_space<vmem>>, %arg3: memref<2x128xf32, #tpu.memory_space<vmem>>) attributes {dimension_semantics = [#tpu.dimension_semantics<parallel>, #tpu.dimension_semantics<parallel>], iteration_bounds = array<i64: 1, 1>, scalar_prefetch = 0 : i64, scratch_operands = 0 : i64, tpu.core_type = #tpu.core_type<tc>, window_params = [{transform_indices = @transform_0, window_bounds = array<i64: 2, 128, 256>}, {transform_indices = @transform_1, window_bounds = array<i64: 2, 128>}]} {
    %c0 = arith.constant 0 : index
    %c0_0 = arith.constant 0 : index
    %c0_1 = arith.constant 0 : index
    %0 = vector.load %arg2[%c0, %c0_0, %c0_1] : memref<2x128x256xf32, #tpu.memory_space<vmem>>, vector<2x128x256xf32>
    %cst = arith.constant dense<0.000000e+00> : vector<2x128xf32>
    %1 = vector.multi_reduction <add>, %0, %cst [2] : vector<2x128x256xf32> to vector<2x128xf32>
    %cst_2 = arith.constant 9.99999997E-7 : f32
    %2 = vector.broadcast %cst_2 : f32 to vector<2x128x256xf32>
    %3 = arith.maximumf %0, %2 : vector<2x128x256xf32>
    %4 = arith.mulf %3, %3 : vector<2x128x256xf32>
    %5 = arith.mulf %4, %3 : vector<2x128x256xf32>
    %cst_3 = arith.constant dense<0.000000e+00> : vector<2x128xf32>
    %6 = vector.multi_reduction <add>, %5, %cst_3 [2] : vector<2x128x256xf32> to vector<2x128xf32>
    %cst_4 = arith.constant 3.906250e-03 : f32
    %7 = vector.broadcast %cst_4 : f32 to vector<2x128xf32>
    %8 = arith.mulf %6, %7 : vector<2x128xf32>
    %9 = math.log %8 : vector<2x128xf32>
    %cst_5 = arith.constant 0.333333343 : f32
    %10 = vector.broadcast %cst_5 : f32 to vector<2x128xf32>
    %11 = arith.mulf %9, %10 : vector<2x128xf32>
    %12 = math.exp %11 : vector<2x128xf32>
    %cst_6 = arith.constant 3.906250e-03 : f32
    %13 = vector.broadcast %cst_6 : f32 to vector<2x128xf32>
    %14 = arith.mulf %1, %13 : vector<2x128xf32>
    %15 = arith.addf %12, %14 : vector<2x128xf32>
    %c0_7 = arith.constant 0 : index
    %c0_8 = arith.constant 0 : index
    %16 = vector.load %arg3[%c0_7, %c0_8] : memref<2x128xf32, #tpu.memory_space<vmem>>, vector<2x128xf32>
    tpu.vector_store %arg3[%c0_7, %c0_8], %15 {strides = array<i32>} : memref<2x128xf32, #tpu.memory_space<vmem>>, vector<2x128xf32>,
    return
  }
  func.func @transform_0(%arg0: i32, %arg1: i32) -> (i32, i32, i32) {
    %c0_i32 = arith.constant 0 : i32
    %c0_i32_0 = arith.constant 0 : i32
    return %arg0, %arg1, %c0_i32 : i32, i32, i32
  }
  func.func @transform_1(%arg0: i32, %arg1: i32) -> (i32, i32) {
    %c0_i32 = arith.constant 0 : i32
    return %arg0, %arg1 : i32, i32
  }
}

</mosaic_0001>

<llo_original>
// kernel: tpu_custom_call.1
$region0: #{tpu_custom_call.1}
  #allocation0 [shape = 'u32[]', space=smem, size = 0x4, offset = 0x4, fixed_abs, tag = 'smem constant byte address 0x4 - core index']
  #allocation1 [shape = 'u32[144,128]{1,0:T(1,128)}', space=vmem, size = 0x12000, scoped, tag = 'internal scratch']
  %s0 = inlined_call_operand.hbm [shape: f32[2,128,256], index: 0, kind: input, shape index: {}]
  %s1 = inlined_call_operand.hbm [shape: f32[2,128], index: 1, kind: output, shape index: {}]
  %s2 = sld [smem:[#allocation0]]
  $region18: #{tpu_custom_call.1} parent=0
    _
  %s4 = ssub.s32 1, %s2
  %s5 = scalar_select 0, %s4, %s2
  $region1: #{tpu_custom_call.1} parent=0
    #allocation2 [shape = 'u8[262144]{0}', space=vmem, size = 0x40000, scoped, tag = 'input window, operand 0, single buffered']
    #allocation3 [shape = 's32[1]{0}', space=sflag, size = 0x4, scoped, tag = 'scoped memory for tpu_custom_call.1']
    #allocation4 [shape = 's32[1]{0}', space=sflag, size = 0x4, scoped, tag = 'scoped memory for tpu_custom_call.1']
    #allocation5 [shape = 'u8[1024]{0}', space=vmem, size = 0x400, scoped, tag = 'output window, operand 0, single buffered']
    %6 = vsyncpa [#allocation3], 0
    %7 = vsyncpa [#allocation4], 0
    // Predicated region
    $region2: #{tpu_custom_call.1} parent=1 // pred_check
      _
    $region3: #{tpu_custom_call.1} parent=1 // pred_check_branch
      %9 = sbr.rel (0) target = $region5
    $region4: #{tpu_custom_call.1} parent=1 // pred_region
      %s11 = ssub.s32 8192, 8192
      %12 = vsyncadd [#allocation3], %s11
      %s13 = sshll.u32 [#allocation2], 4
      %s14 = int_to_ptr.vmem [resolvable:$true] %s13
      %19 = dma.hbm_to_vmem [thread:$0]  %s0, 8192, %s14, [#allocation3], 256, 256, 16
    $region5: #{tpu_custom_call.1} parent=1 // pred_fallthru
      _
    // Predicated region
    $region6: #{tpu_custom_call.1} parent=1 // pred_check
      _
    $region7: #{tpu_custom_call.1} parent=1 // pred_check_branch
      %21 = sbr.rel (0) target = $region9
    $region8: #{tpu_custom_call.1} parent=1 // pred_region
      %22 = dma.done [#allocation3], 8192
    $region9: #{tpu_custom_call.1} parent=1 // pred_fallthru
      _
    %v23 = vld [vmem:[#allocation2] sm:$0xff]
    %v24 = vld [vmem:[#allocation2 + $0x8] sm:$0xff]
    %v25 = vld [vmem:[#allocation2 + $0x10] sm:$0xff]
    %v26 = vld [vmem:[#allocation2 + $0x18] sm:$0xff]
    %v27 = vld [vmem:[#allocation2 + $0x20] sm:$0xff]
    %v28 = vld [vmem:[#allocation2 + $0x28] sm:$0xff]
    %v29 = vld [vmem:[#allocation2 + $0x30] sm:$0xff]
    %v30 = vld [vmem:[#allocation2 + $0x38] sm:$0xff]
    %v31 = vld [vmem:[#allocation2 + $0x40] sm:$0xff]
    %v32 = vld [vmem:[#allocation2 + $0x48] sm:$0xff]
    %v33 = vld [vmem:[#allocation2 + $0x50] sm:$0xff]
    %v34 = vld [vmem:[#allocation2 + $0x58] sm:$0xff]
    %v35 = vld [vmem:[#allocation2 + $0x60] sm:$0xff]
    %v36 = vld [vmem:[#allocation2 + $0x68] sm:$0xff]
    %v37 = vld [vmem:[#allocation2 + $0x70] sm:$0xff]
    %v38 = vld [vmem:[#allocation2 + $0x78] sm:$0xff]
    %v39 = vld [vmem:[#allocation2 + $0x80] sm:$0xff]
    %v40 = vld [vmem:[#allocation2 + $0x88] sm:$0xff]
    %v41 = vld [vmem:[#allocation2 + $0x90] sm:$0xff]
    %v42 = vld [vmem:[#allocation2 + $0x98] sm:$0xff]
    %v43 = vld [vmem:[#allocation2 + $0xa0] sm:$0xff]
    %v44 = vld [vmem:[#allocation2 + $0xa8] sm:$0xff]
    %v45 = vld [vmem:[#allocation2 + $0xb0] sm:$0xff]
    %v46 = vld [vmem:[#allocation2 + $0xb8] sm:$0xff]
    %v47 = vld [vmem:[#allocation2 + $0xc0] sm:$0xff]
    %v48 = vld [vmem:[#allocation2 + $0xc8] sm:$0xff]
    %v49 = vld [vmem:[#allocation2 + $0xd0] sm:$0xff]
    %v50 = vld [vmem:[#allocation2 + $0xd8] sm:$0xff]
    %v51 = vld [vmem:[#allocation2 + $0xe0] sm:$0xff]
    %v52 = vld [vmem:[#allocation2 + $0xe8] sm:$0xff]
    %v53 = vld [vmem:[#allocation2 + $0xf0] sm:$0xff]
    %v54 = vld [vmem:[#allocation2 + $0xf8] sm:$0xff]
    %v55 = vld [vmem:[#allocation2 + $0x100] sm:$0xff]
    %v56 = vld [vmem:[#allocation2 + $0x108] sm:$0xff]
    %v57 = vld [vmem:[#allocation2 + $0x110] sm:$0xff]
    %v58 = vld [vmem:[#allocation2 + $0x118] sm:$0xff]
    %v59 = vld [vmem:[#allocation2 + $0x120] sm:$0xff]
    %v60 = vld [vmem:[#allocation2 + $0x128] sm:$0xff]
    %v61 = vld [vmem:[#allocation2 + $0x130] sm:$0xff]
    %v62 = vld [vmem:[#allocation2 + $0x138] sm:$0xff]
    %v63 = vld [vmem:[#allocation2 + $0x140] sm:$0xff]
    %v64 = vld [vmem:[#allocation2 + $0x148] sm:$0xff]
    %v65 = vld [vmem:[#allocation2 + $0x150] sm:$0xff]
    %v66 = vld [vmem:[#allocation2 + $0x158] sm:$0xff]
    %v67 = vld [vmem:[#allocation2 + $0x160] sm:$0xff]
    %v68 = vld [vmem:[#allocation2 + $0x168] sm:$0xff]
    %v69 = vld [vmem:[#allocation2 + $0x170] sm:$0xff]
    %v70 = vld [vmem:[#allocation2 + $0x178] sm:$0xff]
    %v71 = vld [vmem:[#allocation2 + $0x180] sm:$0xff]
    %v72 = vld [vmem:[#allocation2 + $0x188] sm:$0xff]
    %v73 = vld [vmem:[#allocation2 + $0x190] sm:$0xff]
    %v74 = vld [vmem:[#allocation2 + $0x198] sm:$0xff]
    %v75 = vld [vmem:[#allocation2 + $0x1a0] sm:$0xff]
    %v76 = vld [vmem:[#allocation2 + $0x1a8] sm:$0xff]
    %v77 = vld [vmem:[#allocation2 + $0x1b0] sm:$0xff]
    %v78 = vld [vmem:[#allocation2 + $0x1b8] sm:$0xff]
    %v79 = vld [vmem:[#allocation2 + $0x1c0] sm:$0xff]
    %v80 = vld [vmem:[#allocation2 + $0x1c8] sm:$0xff]
    %v81 = vld [vmem:[#allocation2 + $0x1d0] sm:$0xff]
    %v82 = vld [vmem:[#allocation2 + $0x1d8] sm:$0xff]
    %v83 = vld [vmem:[#allocation2 + $0x1e0] sm:$0xff]
    %v84 = vld [vmem:[#allocation2 + $0x1e8] sm:$0xff]
    %v85 = vld [vmem:[#allocation2 + $0x1f0] sm:$0xff]
    %v86 = vld [vmem:[#allocation2 + $0x1f8] sm:$0xff]
    %v87 = vadd.f32 %v23, %v24
    %88 = vadd.xlane.f32.xlu0 %v87
    %v89 = vpop.xlane.xlu0 %88
    %v90 = vadd.f32 %v25, %v26
    %91 = vadd.xlane.f32.xlu0 %v90
    %v92 = vpop.xlane.xlu0 %91
    %v93 = vadd.f32 %v27, %v28
    %94 = vadd.xlane.f32.xlu0 %v93
    %v95 = vpop.xlane.xlu0 %94
    %v96 = vadd.f32 %v29, %v30
    %97 = vadd.xlane.f32.xlu0 %v96
    %v98 = vpop.xlane.xlu0 %97
    %v99 = vadd.f32 %v31, %v32
    %100 = vadd.xlane.f32.xlu0 %v99
    %v101 = vpop.xlane.xlu0 %100
    %v102 = vadd.f32 %v33, %v34
    %103 = vadd.xlane.f32.xlu0 %v102
    %v104 = vpop.xlane.xlu0 %103
    %v105 = vadd.f32 %v35, %v36
    %106 = vadd.xlane.f32.xlu0 %v105
    %v107 = vpop.xlane.xlu0 %106
    %v108 = vadd.f32 %v37, %v38
    %109 = vadd.xlane.f32.xlu0 %v108
    %v110 = vpop.xlane.xlu0 %109
    %v111 = vadd.f32 %v39, %v40
    %112 = vadd.xlane.f32.xlu0 %v111
    %v113 = vpop.xlane.xlu0 %112
    %v114 = vadd.f32 %v41, %v42
    %115 = vadd.xlane.f32.xlu0 %v114
    %v116 = vpop.xlane.xlu0 %115
    %v117 = vadd.f32 %v43, %v44
    %118 = vadd.xlane.f32.xlu0 %v117
    %v119 = vpop.xlane.xlu0 %118
    %v120 = vadd.f32 %v45, %v46
    %121 = vadd.xlane.f32.xlu0 %v120
    %v122 = vpop.xlane.xlu0 %121
    %v123 = vadd.f32 %v47, %v48
    %124 = vadd.xlane.f32.xlu0 %v123
    %v125 = vpop.xlane.xlu0 %124
    %v126 = vadd.f32 %v49, %v50
    %127 = vadd.xlane.f32.xlu0 %v126
    %v128 = vpop.xlane.xlu0 %127
    %v129 = vadd.f32 %v51, %v52
    %130 = vadd.xlane.f32.xlu0 %v129
    %v131 = vpop.xlane.xlu0 %130
    %v132 = vadd.f32 %v53, %v54
    %133 = vadd.xlane.f32.xlu0 %v132
    %v134 = vpop.xlane.xlu0 %133
    %v135 = vadd.f32 %v55, %v56
    %136 = vadd.xlane.f32.xlu0 %v135
    %v137 = vpop.xlane.xlu0 %136
    %v138 = vadd.f32 %v57, %v58
    %139 = vadd.xlane.f32.xlu0 %v138
    %v140 = vpop.xlane.xlu0 %139
    %v141 = vadd.f32 %v59, %v60
    %142 = vadd.xlane.f32.xlu0 %v141
    %v143 = vpop.xlane.xlu0 %142
    %v144 = vadd.f32 %v61, %v62
    %145 = vadd.xlane.f32.xlu0 %v144
    %v146 = vpop.xlane.xlu0 %145
    %v147 = vadd.f32 %v63, %v64
    %148 = vadd.xlane.f32.xlu0 %v147
    %v149 = vpop.xlane.xlu0 %148
    %v150 = vadd.f32 %v65, %v66
    %151 = vadd.xlane.f32.xlu0 %v150
    %v152 = vpop.xlane.xlu0 %151
    %v153 = vadd.f32 %v67, %v68
    %154 = vadd.xlane.f32.xlu0 %v153
    %v155 = vpop.xlane.xlu0 %154
    %v156 = vadd.f32 %v69, %v70
    %157 = vadd.xlane.f32.xlu0 %v156
    %v158 = vpop.xlane.xlu0 %157
    %v159 = vadd.f32 %v71, %v72
    %160 = vadd.xlane.f32.xlu0 %v159
    %v161 = vpop.xlane.xlu0 %160
    %v162 = vadd.f32 %v73, %v74
    %163 = vadd.xlane.f32.xlu0 %v162
    %v164 = vpop.xlane.xlu0 %163
    %v165 = vadd.f32 %v75, %v76
    %166 = vadd.xlane.f32.xlu0 %v165
    %v167 = vpop.xlane.xlu0 %166
    %v168 = vadd.f32 %v77, %v78
    %169 = vadd.xlane.f32.xlu0 %v168
    %v170 = vpop.xlane.xlu0 %169
    %v171 = vadd.f32 %v79, %v80
    %172 = vadd.xlane.f32.xlu0 %v171
    %v173 = vpop.xlane.xlu0 %172
    %v174 = vadd.f32 %v81, %v82
    %175 = vadd.xlane.f32.xlu0 %v174
    %v176 = vpop.xlane.xlu0 %175
    %v177 = vadd.f32 %v83, %v84
    %178 = vadd.xlane.f32.xlu0 %v177
    %v179 = vpop.xlane.xlu0 %178
    %v180 = vadd.f32 %v85, %v86
    %181 = vadd.xlane.f32.xlu0 %v180
    %v182 = vpop.xlane.xlu0 %181
    %v183 = vmax.f32 %v23, 1e-06
    %v184 = vmax.f32 %v24, 1e-06
    %v185 = vmax.f32 %v25, 1e-06
    %v186 = vmax.f32 %v26, 1e-06
    %v187 = vmax.f32 %v27, 1e-06
    %v188 = vmax.f32 %v28, 1e-06
    %v189 = vmax.f32 %v29, 1e-06
    %v190 = vmax.f32 %v30, 1e-06
    %v191 = vmax.f32 %v31, 1e-06
    %v192 = vmax.f32 %v32, 1e-06
    %v193 = vmax.f32 %v33, 1e-06
    %v194 = vmax.f32 %v34, 1e-06
    %v195 = vmax.f32 %v35, 1e-06
    %v196 = vmax.f32 %v36, 1e-06
    %v197 = vmax.f32 %v37, 1e-06
    %v198 = vmax.f32 %v38, 1e-06
    %v199 = vmax.f32 %v39, 1e-06
    %v200 = vmax.f32 %v40, 1e-06
    %v201 = vmax.f32 %v41, 1e-06
    %v202 = vmax.f32 %v42, 1e-06
    %v203 = vmax.f32 %v43, 1e-06
    %v204 = vmax.f32 %v44, 1e-06
    %v205 = vmax.f32 %v45, 1e-06
    %v206 = vmax.f32 %v46, 1e-06
    %v207 = vmax.f32 %v47, 1e-06
    %v208 = vmax.f32 %v48, 1e-06
    %v209 = vmax.f32 %v49, 1e-06
    %v210 = vmax.f32 %v50, 1e-06
    %v211 = vmax.f32 %v51, 1e-06
    %v212 = vmax.f32 %v52, 1e-06
    %v213 = vmax.f32 %v53, 1e-06
    %v214 = vmax.f32 %v54, 1e-06
    %v215 = vmax.f32 %v55, 1e-06
    %v216 = vmax.f32 %v56, 1e-06
    %v217 = vmax.f32 %v57, 1e-06
    %v218 = vmax.f32 %v58, 1e-06
    %v219 = vmax.f32 %v59, 1e-06
    %v220 = vmax.f32 %v60, 1e-06
    %v221 = vmax.f32 %v61, 1e-06
    %v222 = vmax.f32 %v62, 1e-06
    %v223 = vmax.f32 %v63, 1e-06
    %v224 = vmax.f32 %v64, 1e-06
    %v225 = vmax.f32 %v65, 1e-06
    %v226 = vmax.f32 %v66, 1e-06
    %v227 = vmax.f32 %v67, 1e-06
    %v228 = vmax.f32 %v68, 1e-06
    %v229 = vmax.f32 %v69, 1e-06
    %v230 = vmax.f32 %v70, 1e-06
    %v231 = vmax.f32 %v71, 1e-06
    %v232 = vmax.f32 %v72, 1e-06
    %v233 = vmax.f32 %v73, 1e-06
    %v234 = vmax.f32 %v74, 1e-06
    %v235 = vmax.f32 %v75, 1e-06
    %v236 = vmax.f32 %v76, 1e-06
    %v237 = vmax.f32 %v77, 1e-06
    %v238 = vmax.f32 %v78, 1e-06
    %v239 = vmax.f32 %v79, 1e-06
    %v240 = vmax.f32 %v80, 1e-06
    %v241 = vmax.f32 %v81, 1e-06
    %v242 = vmax.f32 %v82, 1e-06
    %v243 = vmax.f32 %v83, 1e-06
    %v244 = vmax.f32 %v84, 1e-06
    %v245 = vmax.f32 %v85, 1e-06
    %v246 = vmax.f32 %v86, 1e-06
    %v247 = vmul.f32 %v183, %v183
    %v248 = vmul.f32 %v184, %v184
    %v249 = vmul.f32 %v185, %v185
    %v250 = vmul.f32 %v186, %v186
    %v251 = vmul.f32 %v187, %v187
    %v252 = vmul.f32 %v188, %v188
    %v253 = vmul.f32 %v189, %v189
    %v254 = vmul.f32 %v190, %v190
    %v255 = vmul.f32 %v191, %v191
    %v256 = vmul.f32 %v192, %v192
    %v257 = vmul.f32 %v193, %v193
    %v258 = vmul.f32 %v194, %v194
    %v259 = vmul.f32 %v195, %v195
    %v260 = vmul.f32 %v196, %v196
    %v261 = vmul.f32 %v197, %v197
    %v262 = vmul.f32 %v198, %v198
    %v263 = vmul.f32 %v199, %v199
    %v264 = vmul.f32 %v200, %v200
    %v265 = vmul.f32 %v201, %v201
    %v266 = vmul.f32 %v202, %v202
    %v267 = vmul.f32 %v203, %v203
    %v268 = vmul.f32 %v204, %v204
    %v269 = vmul.f32 %v205, %v205
    %v270 = vmul.f32 %v206, %v206
    %v271 = vmul.f32 %v207, %v207
    %v272 = vmul.f32 %v208, %v208
    %v273 = vmul.f32 %v209, %v209
    %v274 = vmul.f32 %v210, %v210
    %v275 = vmul.f32 %v211, %v211
    %v276 = vmul.f32 %v212, %v212
    %v277 = vmul.f32 %v213, %v213
    %v278 = vmul.f32 %v214, %v214
    %v279 = vmul.f32 %v215, %v215
    %v280 = vmul.f32 %v216, %v216
    %v281 = vmul.f32 %v217, %v217
    %v282 = vmul.f32 %v218, %v218
    %v283 = vmul.f32 %v219, %v219
    %v284 = vmul.f32 %v220, %v220
    %v285 = vmul.f32 %v221, %v221
    %v286 = vmul.f32 %v222, %v222
    %v287 = vmul.f32 %v223, %v223
    %v288 = vmul.f32 %v224, %v224
    %v289 = vmul.f32 %v225, %v225
    %v290 = vmul.f32 %v226, %v226
    %v291 = vmul.f32 %v227, %v227
    %v292 = vmul.f32 %v228, %v228
    %v293 = vmul.f32 %v229, %v229
    %v294 = vmul.f32 %v230, %v230
    %v295 = vmul.f32 %v231, %v231
    %v296 = vmul.f32 %v232, %v232
    %v297 = vmul.f32 %v233, %v233
    %v298 = vmul.f32 %v234, %v234
    %v299 = vmul.f32 %v235, %v235
    %v300 = vmul.f32 %v236, %v236
    %v301 = vmul.f32 %v237, %v237
    %v302 = vmul.f32 %v238, %v238
    %v303 = vmul.f32 %v239, %v239
    %v304 = vmul.f32 %v240, %v240
    %v305 = vmul.f32 %v241, %v241
    %v306 = vmul.f32 %v242, %v242
    %v307 = vmul.f32 %v243, %v243
    %v308 = vmul.f32 %v244, %v244
    %v309 = vmul.f32 %v245, %v245
    %v310 = vmul.f32 %v246, %v246
    %v311 = vmul.f32 %v247, %v183
    %v312 = vmul.f32 %v248, %v184
    %v313 = vmul.f32 %v249, %v185
    %v314 = vmul.f32 %v250, %v186
    %v315 = vmul.f32 %v251, %v187
    %v316 = vmul.f32 %v252, %v188
    %v317 = vmul.f32 %v253, %v189
    %v318 = vmul.f32 %v254, %v190
    %v319 = vmul.f32 %v255, %v191
    %v320 = vmul.f32 %v256, %v192
    %v321 = vmul.f32 %v257, %v193
    %v322 = vmul.f32 %v258, %v194
    %v323 = vmul.f32 %v259, %v195
    %v324 = vmul.f32 %v260, %v196
    %v325 = vmul.f32 %v261, %v197
    %v326 = vmul.f32 %v262, %v198
    %v327 = vmul.f32 %v263, %v199
    %v328 = vmul.f32 %v264, %v200
    %v329 = vmul.f32 %v265, %v201
    %v330 = vmul.f32 %v266, %v202
    %v331 = vmul.f32 %v267, %v203
    %v332 = vmul.f32 %v268, %v204
    %v333 = vmul.f32 %v269, %v205
    %v334 = vmul.f32 %v270, %v206
    %v335 = vmul.f32 %v271, %v207
    %v336 = vmul.f32 %v272, %v208
    %v337 = vmul.f32 %v273, %v209
    %v338 = vmul.f32 %v274, %v210
    %v339 = vmul.f32 %v275, %v211
    %v340 = vmul.f32 %v276, %v212
    %v341 = vmul.f32 %v277, %v213
    %v342 = vmul.f32 %v278, %v214
    %v343 = vmul.f32 %v279, %v215
    %v344 = vmul.f32 %v280, %v216
    %v345 = vmul.f32 %v281, %v217
    %v346 = vmul.f32 %v282, %v218
    %v347 = vmul.f32 %v283, %v219
    %v348 = vmul.f32 %v284, %v220
    %v349 = vmul.f32 %v285, %v221
    %v350 = vmul.f32 %v286, %v222
    %v351 = vmul.f32 %v287, %v223
    %v352 = vmul.f32 %v288, %v224
    %v353 = vmul.f32 %v289, %v225
    %v354 = vmul.f32 %v290, %v226
    %v355 = vmul.f32 %v291, %v227
    %v356 = vmul.f32 %v292, %v228
    %v357 = vmul.f32 %v293, %v229
    %v358 = vmul.f32 %v294, %v230
    %v359 = vmul.f32 %v295, %v231
    %v360 = vmul.f32 %v296, %v232
    %v361 = vmul.f32 %v297, %v233
    %v362 = vmul.f32 %v298, %v234
    %v363 = vmul.f32 %v299, %v235
    %v364 = vmul.f32 %v300, %v236
    %v365 = vmul.f32 %v301, %v237
    %v366 = vmul.f32 %v302, %v238
    %v367 = vmul.f32 %v303, %v239
    %v368 = vmul.f32 %v304, %v240
    %v369 = vmul.f32 %v305, %v241
    %v370 = vmul.f32 %v306, %v242
    %v371 = vmul.f32 %v307, %v243
    %v372 = vmul.f32 %v308, %v244
    %v373 = vmul.f32 %v309, %v245
    %v374 = vmul.f32 %v310, %v246
    %v375 = vadd.f32 %v311, %v312
    %376 = vadd.xlane.f32.xlu0 %v375
    %v377 = vpop.xlane.xlu0 %376
    %v378 = vadd.f32 %v313, %v314
    %379 = vadd.xlane.f32.xlu0 %v378
    %v380 = vpop.xlane.xlu0 %379
    %v381 = vadd.f32 %v315, %v316
    %382 = vadd.xlane.f32.xlu0 %v381
    %v383 = vpop.xlane.xlu0 %382
    %v384 = vadd.f32 %v317, %v318
    %385 = vadd.xlane.f32.xlu0 %v384
    %v386 = vpop.xlane.xlu0 %385
    %v387 = vadd.f32 %v319, %v320
    %388 = vadd.xlane.f32.xlu0 %v387
    %v389 = vpop.xlane.xlu0 %388
    %v390 = vadd.f32 %v321, %v322
    %391 = vadd.xlane.f32.xlu0 %v390
    %v392 = vpop.xlane.xlu0 %391
    %v393 = vadd.f32 %v323, %v324
    %394 = vadd.xlane.f32.xlu0 %v393
    %v395 = vpop.xlane.xlu0 %394
    %v396 = vadd.f32 %v325, %v326
    %397 = vadd.xlane.f32.xlu0 %v396
    %v398 = vpop.xlane.xlu0 %397
    %v399 = vadd.f32 %v327, %v328
    %400 = vadd.xlane.f32.xlu0 %v399
    %v401 = vpop.xlane.xlu0 %400
    %v402 = vadd.f32 %v329, %v330
    %403 = vadd.xlane.f32.xlu0 %v402
    %v404 = vpop.xlane.xlu0 %403
    %v405 = vadd.f32 %v331, %v332
    %406 = vadd.xlane.f32.xlu0 %v405
    %v407 = vpop.xlane.xlu0 %406
    %v408 = vadd.f32 %v333, %v334
    %409 = vadd.xlane.f32.xlu0 %v408
    %v410 = vpop.xlane.xlu0 %409
    %v411 = vadd.f32 %v335, %v336
    %412 = vadd.xlane.f32.xlu0 %v411
    %v413 = vpop.xlane.xlu0 %412
    %v414 = vadd.f32 %v337, %v338
    %415 = vadd.xlane.f32.xlu0 %v414
    %v416 = vpop.xlane.xlu0 %415
    %v417 = vadd.f32 %v339, %v340
    %418 = vadd.xlane.f32.xlu0 %v417
    %v419 = vpop.xlane.xlu0 %418
    %v420 = vadd.f32 %v341, %v342
    %421 = vadd.xlane.f32.xlu0 %v420
    %v422 = vpop.xlane.xlu0 %421
    %v423 = vadd.f32 %v343, %v344
    %424 = vadd.xlane.f32.xlu0 %v423
    %v425 = vpop.xlane.xlu0 %424
    %v426 = vadd.f32 %v345, %v346
    %427 = vadd.xlane.f32.xlu0 %v426
    %v428 = vpop.xlane.xlu0 %427
    %v429 = vadd.f32 %v347, %v348
    %430 = vadd.xlane.f32.xlu0 %v429
    %v431 = vpop.xlane.xlu0 %430
    %v432 = vadd.f32 %v349, %v350
    %433 = vadd.xlane.f32.xlu0 %v432
    %v434 = vpop.xlane.xlu0 %433
    %v435 = vadd.f32 %v351, %v352
    %436 = vadd.xlane.f32.xlu0 %v435
    %v437 = vpop.xlane.xlu0 %436
    %v438 = vadd.f32 %v353, %v354
    %439 = vadd.xlane.f32.xlu0 %v438
    %v440 = vpop.xlane.xlu0 %439
    %v441 = vadd.f32 %v355, %v356
    %442 = vadd.xlane.f32.xlu0 %v441
    %v443 = vpop.xlane.xlu0 %442
    %v444 = vadd.f32 %v357, %v358
    %445 = vadd.xlane.f32.xlu0 %v444
    %v446 = vpop.xlane.xlu0 %445
    %v447 = vadd.f32 %v359, %v360
    %448 = vadd.xlane.f32.xlu0 %v447
    %v449 = vpop.xlane.xlu0 %448
    %v450 = vadd.f32 %v361, %v362
    %451 = vadd.xlane.f32.xlu0 %v450
    %v452 = vpop.xlane.xlu0 %451
    %v453 = vadd.f32 %v363, %v364
    %454 = vadd.xlane.f32.xlu0 %v453
    %v455 = vpop.xlane.xlu0 %454
    %v456 = vadd.f32 %v365, %v366
    %457 = vadd.xlane.f32.xlu0 %v456
    %v458 = vpop.xlane.xlu0 %457
    %v459 = vadd.f32 %v367, %v368
    %460 = vadd.xlane.f32.xlu0 %v459
    %v461 = vpop.xlane.xlu0 %460
    %v462 = vadd.f32 %v369, %v370
    %463 = vadd.xlane.f32.xlu0 %v462
    %v464 = vpop.xlane.xlu0 %463
    %v465 = vadd.f32 %v371, %v372
    %466 = vadd.xlane.f32.xlu0 %v465
    %v467 = vpop.xlane.xlu0 %466
    %v468 = vadd.f32 %v373, %v374
    %469 = vadd.xlane.f32.xlu0 %v468
    %v470 = vpop.xlane.xlu0 %469
    %v471 = vmul.f32 %v377, 0.00390625
    %v472 = vmul.f32 %v380, 0.00390625
    %v473 = vmul.f32 %v383, 0.00390625
    %v474 = vmul.f32 %v386, 0.00390625
    %v475 = vmul.f32 %v389, 0.00390625
    %v476 = vmul.f32 %v392, 0.00390625
    %v477 = vmul.f32 %v395, 0.00390625
    %v478 = vmul.f32 %v398, 0.00390625
    %v479 = vmul.f32 %v401, 0.00390625
    %v480 = vmul.f32 %v404, 0.00390625
    %v481 = vmul.f32 %v407, 0.00390625
    %v482 = vmul.f32 %v410, 0.00390625
    %v483 = vmul.f32 %v413, 0.00390625
    %v484 = vmul.f32 %v416, 0.00390625
    %v485 = vmul.f32 %v419, 0.00390625
    %v486 = vmul.f32 %v422, 0.00390625
    %v487 = vmul.f32 %v425, 0.00390625
    %v488 = vmul.f32 %v428, 0.00390625
    %v489 = vmul.f32 %v431, 0.00390625
    %v490 = vmul.f32 %v434, 0.00390625
    %v491 = vmul.f32 %v437, 0.00390625
    %v492 = vmul.f32 %v440, 0.00390625
    %v493 = vmul.f32 %v443, 0.00390625
    %v494 = vmul.f32 %v446, 0.00390625
    %v495 = vmul.f32 %v449, 0.00390625
    %v496 = vmul.f32 %v452, 0.00390625
    %v497 = vmul.f32 %v455, 0.00390625
    %v498 = vmul.f32 %v458, 0.00390625
    %v499 = vmul.f32 %v461, 0.00390625
    %v500 = vmul.f32 %v464, 0.00390625
    %v501 = vmul.f32 %v467, 0.00390625
    %v502 = vmul.f32 %v470, 0.00390625
    %v503 = vlog2.pop %v471
    %v504 = vmul.f32 %v503, 0.6931472
    %v505 = vlog2.pop %v472
    %v506 = vmul.f32 %v505, 0.6931472
    %v507 = vlog2.pop %v473
    %v508 = vmul.f32 %v507, 0.6931472
    %v509 = vlog2.pop %v474
    %v510 = vmul.f32 %v509, 0.6931472
    %v511 = vlog2.pop %v475
    %v512 = vmul.f32 %v511, 0.6931472
    %v513 = vlog2.pop %v476
    %v514 = vmul.f32 %v513, 0.6931472
    %v515 = vlog2.pop %v477
    %v516 = vmul.f32 %v515, 0.6931472
    %v517 = vlog2.pop %v478
    %v518 = vmul.f32 %v517, 0.6931472
    %v519 = vlog2.pop %v479
    %v520 = vmul.f32 %v519, 0.6931472
    %v521 = vlog2.pop %v480
    %v522 = vmul.f32 %v521, 0.6931472
    %v523 = vlog2.pop %v481
    %v524 = vmul.f32 %v523, 0.6931472
    %v525 = vlog2.pop %v482
    %v526 = vmul.f32 %v525, 0.6931472
    %v527 = vlog2.pop %v483
    %v528 = vmul.f32 %v527, 0.6931472
    %v529 = vlog2.pop %v484
    %v530 = vmul.f32 %v529, 0.6931472
    %v531 = vlog2.pop %v485
    %v532 = vmul.f32 %v531, 0.6931472
    %v533 = vlog2.pop %v486
    %v534 = vmul.f32 %v533, 0.6931472
    %v535 = vlog2.pop %v487
    %v536 = vmul.f32 %v535, 0.6931472
    %v537 = vlog2.pop %v488
    %v538 = vmul.f32 %v537, 0.6931472
    %v539 = vlog2.pop %v489
    %v540 = vmul.f32 %v539, 0.6931472
    %v541 = vlog2.pop %v490
    %v542 = vmul.f32 %v541, 0.6931472
    %v543 = vlog2.pop %v491
    %v544 = vmul.f32 %v543, 0.6931472
    %v545 = vlog2.pop %v492
    %v546 = vmul.f32 %v545, 0.6931472
    %v547 = vlog2.pop %v493
    %v548 = vmul.f32 %v547, 0.6931472
    %v549 = vlog2.pop %v494
    %v550 = vmul.f32 %v549, 0.6931472
    %v551 = vlog2.pop %v495
    %v552 = vmul.f32 %v551, 0.6931472
    %v553 = vlog2.pop %v496
    %v554 = vmul.f32 %v553, 0.6931472
    %v555 = vlog2.pop %v497
    %v556 = vmul.f32 %v555, 0.6931472
    %v557 = vlog2.pop %v498
    %v558 = vmul.f32 %v557, 0.6931472
    %v559 = vlog2.pop %v499
    %v560 = vmul.f32 %v559, 0.6931472
    %v561 = vlog2.pop %v500
    %v562 = vmul.f32 %v561, 0.6931472
    %v563 = vlog2.pop %v501
    %v564 = vmul.f32 %v563, 0.6931472
    %v565 = vlog2.pop %v502
    %v566 = vmul.f32 %v565, 0.6931472
    %v567 = vmul.f32 %v504, 0.33333334
    %v568 = vmul.f32 %v506, 0.33333334
    %v569 = vmul.f32 %v508, 0.33333334
    %v570 = vmul.f32 %v510, 0.33333334
    %v571 = vmul.f32 %v512, 0.33333334
    %v572 = vmul.f32 %v514, 0.33333334
    %v573 = vmul.f32 %v516, 0.33333334
    %v574 = vmul.f32 %v518, 0.33333334
    %v575 = vmul.f32 %v520, 0.33333334
    %v576 = vmul.f32 %v522, 0.33333334
    %v577 = vmul.f32 %v524, 0.33333334
    %v578 = vmul.f32 %v526, 0.33333334
    %v579 = vmul.f32 %v528, 0.33333334
    %v580 = vmul.f32 %v530, 0.33333334
    %v581 = vmul.f32 %v532, 0.33333334
    %v582 = vmul.f32 %v534, 0.33333334
    %v583 = vmul.f32 %v536, 0.33333334
    %v584 = vmul.f32 %v538, 0.33333334
    %v585 = vmul.f32 %v540, 0.33333334
    %v586 = vmul.f32 %v542, 0.33333334
    %v587 = vmul.f32 %v544, 0.33333334
    %v588 = vmul.f32 %v546, 0.33333334
    %v589 = vmul.f32 %v548, 0.33333334
    %v590 = vmul.f32 %v550, 0.33333334
    %v591 = vmul.f32 %v552, 0.33333334
    %v592 = vmul.f32 %v554, 0.33333334
    %v593 = vmul.f32 %v556, 0.33333334
    %v594 = vmul.f32 %v558, 0.33333334
    %v595 = vmul.f32 %v560, 0.33333334
    %v596 = vmul.f32 %v562, 0.33333334
    %v597 = vmul.f32 %v564, 0.33333334
    %v598 = vmul.f32 %v566, 0.33333334
    %v599 = vmul.f32 %v567, 1.442695
    %v600 = vpow.pop %v599
    %v601 = vmul.f32 %v568, 1.442695
    %v602 = vpow.pop %v601
    %v603 = vmul.f32 %v569, 1.442695
    %v604 = vpow.pop %v603
    %v605 = vmul.f32 %v570, 1.442695
    %v606 = vpow.pop %v605
    %v607 = vmul.f32 %v571, 1.442695
    %v608 = vpow.pop %v607
    %v609 = vmul.f32 %v572, 1.442695
    %v610 = vpow.pop %v609
    %v611 = vmul.f32 %v573, 1.442695
    %v612 = vpow.pop %v611
    %v613 = vmul.f32 %v574, 1.442695
    %v614 = vpow.pop %v613
    %v615 = vmul.f32 %v575, 1.442695
    %v616 = vpow.pop %v615
    %v617 = vmul.f32 %v576, 1.442695
    %v618 = vpow.pop %v617
    %v619 = vmul.f32 %v577, 1.442695
    %v620 = vpow.pop %v619
    %v621 = vmul.f32 %v578, 1.442695
    %v622 = vpow.pop %v621
    %v623 = vmul.f32 %v579, 1.442695
    %v624 = vpow.pop %v623
    %v625 = vmul.f32 %v580, 1.442695
    %v626 = vpow.pop %v625
    %v627 = vmul.f32 %v581, 1.442695
    %v628 = vpow.pop %v627
    %v629 = vmul.f32 %v582, 1.442695
    %v630 = vpow.pop %v629
    %v631 = vmul.f32 %v583, 1.442695
    %v632 = vpow.pop %v631
    %v633 = vmul.f32 %v584, 1.442695
    %v634 = vpow.pop %v633
    %v635 = vmul.f32 %v585, 1.442695
    %v636 = vpow.pop %v635
    %v637 = vmul.f32 %v586, 1.442695
    %v638 = vpow.pop %v637
    %v639 = vmul.f32 %v587, 1.442695
    %v640 = vpow.pop %v639
    %v641 = vmul.f32 %v588, 1.442695
    %v642 = vpow.pop %v641
    %v643 = vmul.f32 %v589, 1.442695
    %v644 = vpow.pop %v643
    %v645 = vmul.f32 %v590, 1.442695
    %v646 = vpow.pop %v645
    %v647 = vmul.f32 %v591, 1.442695
    %v648 = vpow.pop %v647
    %v649 = vmul.f32 %v592, 1.442695
    %v650 = vpow.pop %v649
    %v651 = vmul.f32 %v593, 1.442695
    %v652 = vpow.pop %v651
    %v653 = vmul.f32 %v594, 1.442695
    %v654 = vpow.pop %v653
    %v655 = vmul.f32 %v595, 1.442695
    %v656 = vpow.pop %v655
    %v657 = vmul.f32 %v596, 1.442695
    %v658 = vpow.pop %v657
    %v659 = vmul.f32 %v597, 1.442695
    %v660 = vpow.pop %v659
    %v661 = vmul.f32 %v598, 1.442695
    %v662 = vpow.pop %v661
    %v663 = vmul.f32 %v89, 0.00390625
    %v664 = vmul.f32 %v92, 0.00390625
    %v665 = vmul.f32 %v95, 0.00390625
    %v666 = vmul.f32 %v98, 0.00390625
    %v667 = vmul.f32 %v101, 0.00390625
    %v668 = vmul.f32 %v104, 0.00390625
    %v669 = vmul.f32 %v107, 0.00390625
    %v670 = vmul.f32 %v110, 0.00390625
    %v671 = vmul.f32 %v113, 0.00390625
    %v672 = vmul.f32 %v116, 0.00390625
    %v673 = vmul.f32 %v119, 0.00390625
    %v674 = vmul.f32 %v122, 0.00390625
    %v675 = vmul.f32 %v125, 0.00390625
    %v676 = vmul.f32 %v128, 0.00390625
    %v677 = vmul.f32 %v131, 0.00390625
    %v678 = vmul.f32 %v134, 0.00390625
    %v679 = vmul.f32 %v137, 0.00390625
    %v680 = vmul.f32 %v140, 0.00390625
    %v681 = vmul.f32 %v143, 0.00390625
    %v682 = vmul.f32 %v146, 0.00390625
    %v683 = vmul.f32 %v149, 0.00390625
    %v684 = vmul.f32 %v152, 0.00390625
    %v685 = vmul.f32 %v155, 0.00390625
    %v686 = vmul.f32 %v158, 0.00390625
    %v687 = vmul.f32 %v161, 0.00390625
    %v688 = vmul.f32 %v164, 0.00390625
    %v689 = vmul.f32 %v167, 0.00390625
    %v690 = vmul.f32 %v170, 0.00390625
    %v691 = vmul.f32 %v173, 0.00390625
    %v692 = vmul.f32 %v176, 0.00390625
    %v693 = vmul.f32 %v179, 0.00390625
    %v694 = vmul.f32 %v182, 0.00390625
    %v695 = vadd.f32 %v600, %v663
    %v696 = vadd.f32 %v602, %v664
    %v697 = vadd.f32 %v604, %v665
    %v698 = vadd.f32 %v606, %v666
    %v699 = vadd.f32 %v608, %v667
    %v700 = vadd.f32 %v610, %v668
    %v701 = vadd.f32 %v612, %v669
    %v702 = vadd.f32 %v614, %v670
    %v703 = vadd.f32 %v616, %v671
    %v704 = vadd.f32 %v618, %v672
    %v705 = vadd.f32 %v620, %v673
    %v706 = vadd.f32 %v622, %v674
    %v707 = vadd.f32 %v624, %v675
    %v708 = vadd.f32 %v626, %v676
    %v709 = vadd.f32 %v628, %v677
    %v710 = vadd.f32 %v630, %v678
    %v711 = vadd.f32 %v632, %v679
    %v712 = vadd.f32 %v634, %v680
    %v713 = vadd.f32 %v636, %v681
    %v714 = vadd.f32 %v638, %v682
    %v715 = vadd.f32 %v640, %v683
    %v716 = vadd.f32 %v642, %v684
    %v717 = vadd.f32 %v644, %v685
    %v718 = vadd.f32 %v646, %v686
    %v719 = vadd.f32 %v648, %v687
    %v720 = vadd.f32 %v650, %v688
    %v721 = vadd.f32 %v652, %v689
    %v722 = vadd.f32 %v654, %v690
    %v723 = vadd.f32 %v656, %v691
    %v724 = vadd.f32 %v658, %v692
    %v725 = vadd.f32 %v660, %v693
    %v726 = vadd.f32 %v662, %v694
    %v759 = vlaneseq
    %v760 = vand.u32 %v759, 127
    %v761 = vlaneseq
    %v762 = vshrl.u32 %v761, 7
    %v763 = vsub.s32 %v760, %v762
    %v764 = vrot.slane %v695, %v763
    %v765 = vadd.s32 %v760, 4294967288
    %v766 = vlaneseq
    %v767 = vshrl.u32 %v766, 7
    %v768 = vsub.s32 %v765, %v767
    %v769 = vrot.slane %v696, %v768
    %vm770 = vcmask 130112
    %v771 = vsel %vm770, %v769, %v764
    %v772 = vadd.s32 %v760, 4294967280
    %v773 = vlaneseq
    %v774 = vshrl.u32 %v773, 7
    %v775 = vsub.s32 %v772, %v774
    %v776 = vrot.slane %v697, %v775
    %vm777 = vcmask 195712
    %v778 = vsel %vm777, %v776, %v771
    %v779 = vadd.s32 %v760, 4294967272
    %v780 = vlaneseq
    %v781 = vshrl.u32 %v780, 7
    %v782 = vsub.s32 %v779, %v781
    %v783 = vrot.slane %v698, %v782
    %vm784 = vcmask 261312
    %v785 = vsel %vm784, %v783, %v778
    %v786 = vadd.s32 %v760, 4294967264
    %v787 = vlaneseq
    %v788 = vshrl.u32 %v787, 7
    %v789 = vsub.s32 %v786, %v788
    %v790 = vrot.slane %v699, %v789
    %vm791 = vcmask 326912
    %v792 = vsel %vm791, %v790, %v785
    %v793 = vadd.s32 %v760, 4294967256
    %v794 = vlaneseq
    %v795 = vshrl.u32 %v794, 7
    %v796 = vsub.s32 %v793, %v795
    %v797 = vrot.slane %v700, %v796
    %vm798 = vcmask 392512
    %v799 = vsel %vm798, %v797, %v792
    %v800 = vadd.s32 %v760, 4294967248
    %v801 = vlaneseq
    %v802 = vshrl.u32 %v801, 7
    %v803 = vsub.s32 %v800, %v802
    %v804 = vrot.slane %v701, %v803
    %vm805 = vcmask 458112
    %v806 = vsel %vm805, %v804, %v799
    %v807 = vadd.s32 %v760, 4294967240
    %v808 = vlaneseq
    %v809 = vshrl.u32 %v808, 7
    %v810 = vsub.s32 %v807, %v809
    %v811 = vrot.slane %v702, %v810
    %vm812 = vcmask 523712
    %v813 = vsel %vm812, %v811, %v806
    %v814 = vadd.s32 %v760, 4294967232
    %v815 = vlaneseq
    %v816 = vshrl.u32 %v815, 7
    %v817 = vsub.s32 %v814, %v816
    %v818 = vrot.slane %v703, %v817
    %vm819 = vcmask 589312
    %v820 = vsel %vm819, %v818, %v813
    %v821 = vadd.s32 %v760, 4294967224
    %v822 = vlaneseq
    %v823 = vshrl.u32 %v822, 7
    %v824 = vsub.s32 %v821, %v823
    %v825 = vrot.slane %v704, %v824
    %vm826 = vcmask 654912
    %v827 = vsel %vm826, %v825, %v820
    %v828 = vadd.s32 %v760, 4294967216
    %v829 = vlaneseq
    %v830 = vshrl.u32 %v829, 7
    %v831 = vsub.s32 %v828, %v830
    %v832 = vrot.slane %v705, %v831
    %vm833 = vcmask 720512
    %v834 = vsel %vm833, %v832, %v827
    %v835 = vadd.s32 %v760, 4294967208
    %v836 = vlaneseq
    %v837 = vshrl.u32 %v836, 7
    %v838 = vsub.s32 %v835, %v837
    %v839 = vrot.slane %v706, %v838
    %vm840 = vcmask 786112
    %v841 = vsel %vm840, %v839, %v834
    %v842 = vadd.s32 %v760, 4294967200
    %v843 = vlaneseq
    %v844 = vshrl.u32 %v843, 7
    %v845 = vsub.s32 %v842, %v844
    %v846 = vrot.slane %v707, %v845
    %vm847 = vcmask 851712
    %v848 = vsel %vm847, %v846, %v841
    %v849 = vadd.s32 %v760, 4294967192
    %v850 = vlaneseq
    %v851 = vshrl.u32 %v850, 7
    %v852 = vsub.s32 %v849, %v851
    %v853 = vrot.slane %v708, %v852
    %vm854 = vcmask 917312
    %v855 = vsel %vm854, %v853, %v848
    %v856 = vadd.s32 %v760, 4294967184
    %v857 = vlaneseq
    %v858 = vshrl.u32 %v857, 7
    %v859 = vsub.s32 %v856, %v858
    %v860 = vrot.slane %v709, %v859
    %vm861 = vcmask 982912
    %v862 = vsel %vm861, %v860, %v855
    %v863 = vadd.s32 %v760, 4294967176
    %v864 = vlaneseq
    %v865 = vshrl.u32 %v864, 7
    %v866 = vsub.s32 %v863, %v865
    %v867 = vrot.slane %v710, %v866
    %vm868 = vcmask 1048512
    %v869 = vsel %vm868, %v867, %v862
    %v870 = vlaneseq
    %v871 = vshrl.u32 %v870, 7
    %v872 = vsub.s32 %v760, %v871
    %v873 = vrot.slane %v711, %v872
    %v874 = vlaneseq
    %v875 = vshrl.u32 %v874, 7
    %v876 = vsub.s32 %v765, %v875
    %v877 = vrot.slane %v712, %v876
    %v878 = vsel %vm770, %v877, %v873
    %v879 = vlaneseq
    %v880 = vshrl.u32 %v879, 7
    %v881 = vsub.s32 %v772, %v880
    %v882 = vrot.slane %v713, %v881
    %v883 = vsel %vm777, %v882, %v878
    %v884 = vlaneseq
    %v885 = vshrl.u32 %v884, 7
    %v886 = vsub.s32 %v779, %v885
    %v887 = vrot.slane %v714, %v886
    %v888 = vsel %vm784, %v887, %v883
    %v889 = vlaneseq
    %v890 = vshrl.u32 %v889, 7
    %v891 = vsub.s32 %v786, %v890
    %v892 = vrot.slane %v715, %v891
    %v893 = vsel %vm791, %v892, %v888
    %v894 = vlaneseq
    %v895 = vshrl.u32 %v894, 7
    %v896 = vsub.s32 %v793, %v895
    %v897 = vrot.slane %v716, %v896
    %v898 = vsel %vm798, %v897, %v893
    %v899 = vlaneseq
    %v900 = vshrl.u32 %v899, 7
    %v901 = vsub.s32 %v800, %v900
    %v902 = vrot.slane %v717, %v901
    %v903 = vsel %vm805, %v902, %v898
    %v904 = vlaneseq
    %v905 = vshrl.u32 %v904, 7
    %v906 = vsub.s32 %v807, %v905
    %v907 = vrot.slane %v718, %v906
    %v908 = vsel %vm812, %v907, %v903
    %v909 = vlaneseq
    %v910 = vshrl.u32 %v909, 7
    %v911 = vsub.s32 %v814, %v910
    %v912 = vrot.slane %v719, %v911
    %v913 = vsel %vm819, %v912, %v908
    %v914 = vlaneseq
    %v915 = vshrl.u32 %v914, 7
    %v916 = vsub.s32 %v821, %v915
    %v917 = vrot.slane %v720, %v916
    %v918 = vsel %vm826, %v917, %v913
    %v919 = vlaneseq
    %v920 = vshrl.u32 %v919, 7
    %v921 = vsub.s32 %v828, %v920
    %v922 = vrot.slane %v721, %v921
    %v923 = vsel %vm833, %v922, %v918
    %v924 = vlaneseq
    %v925 = vshrl.u32 %v924, 7
    %v926 = vsub.s32 %v835, %v925
    %v927 = vrot.slane %v722, %v926
    %v928 = vsel %vm840, %v927, %v923
    %v929 = vlaneseq
    %v930 = vshrl.u32 %v929, 7
    %v931 = vsub.s32 %v842, %v930
    %v932 = vrot.slane %v723, %v931
    %v933 = vsel %vm847, %v932, %v928
    %v934 = vlaneseq
    %v935 = vshrl.u32 %v934, 7
    %v936 = vsub.s32 %v849, %v935
    %v937 = vrot.slane %v724, %v936
    %v938 = vsel %vm854, %v937, %v933
    %v939 = vlaneseq
    %v940 = vshrl.u32 %v939, 7
    %v941 = vsub.s32 %v856, %v940
    %v942 = vrot.slane %v725, %v941
    %v943 = vsel %vm861, %v942, %v938
    %v944 = vlaneseq
    %v945 = vshrl.u32 %v944, 7
    %v946 = vsub.s32 %v863, %v945
    %v947 = vrot.slane %v726, %v946
    %v948 = vsel %vm868, %v947, %v943
    %vm949 = vcmask 1041409
    %v950 = vsel %vm949, %v948, %v869
    %952 = vst [vmem:[#allocation5] sm:$0x3] %v950
    // Predicated region
    $region10: #{tpu_custom_call.1} parent=1 // pred_check
      _
    $region11: #{tpu_custom_call.1} parent=1 // pred_check_branch
      %954 = sbr.rel (0) target = $region13
    $region12: #{tpu_custom_call.1} parent=1 // pred_region
      %s956 = ssub.s32 32, 32
      %957 = vsyncadd [#allocation4], %s956
      %s959 = sshll.u32 [#allocation5], 4
      %s960 = int_to_ptr.vmem [resolvable:$true] %s959
      %962 = dma.vmem_to_hbm [thread:$0]  %s960, 32, %s1, [#allocation4]
    $region13: #{tpu_custom_call.1} parent=1 // pred_fallthru
      _
    // Predicated region
    $region14: #{tpu_custom_call.1} parent=1 // pred_check
      _
    $region15: #{tpu_custom_call.1} parent=1 // pred_check_branch
      %964 = sbr.rel (0) target = $region17
    $region16: #{tpu_custom_call.1} parent=1 // pred_region
      %965 = dma.done [#allocation4], 32
    $region17: #{tpu_custom_call.1} parent=1 // pred_fallthru
      _
    %966 = vsyncpa [#allocation3], 1
    %967 = vsyncpa [#allocation4], 1

</llo_original>
